<compile_context>
chip_gen: v5e
topology: v5e:2x2
jax: 0.10.0
libtpu: 0.0.40
codegen_flags: <defaults>
</compile_context>

<pallas_src>
import functools

import jax
import jax.numpy as jnp
from jax import lax
from jax.experimental import pallas as pl
from jax.experimental.pallas import tpu as pltpu

# Deterministic "parameters" from __init__ (margin is a frozen nn.Parameter and
# never used in the forward math; KGEmargin cancels inside the abs()).
MARGIN = 6.0
KGE_MARGIN = 6.0
DELTA = 1.0

LANES = 128        # vreg lane width
SUBLANES = 8       # vreg sublane count
_CHUNK_ROWS = 512  # rows per inner compute chunk: 512*128*4 B = 256 KiB temps


def _huber_partial_kernel(t_ref, s_ref, tot_ref, pos_ref, *,
                          tile_rows, chunk_rows, total_rows, n_cols):
    """One grid step: stream one (tile_rows, 128) block of each input through
    the VPU in chunk_rows-row slices, accumulating (8, 128) lane-parallel
    partial sums of all Huber values and of the positive-column Huber values.
    """
    block_row0 = pl.program_id(0) * tile_rows
    # Static (Python-level) facts about this call:
    needs_row_mask = (total_rows % tile_rows) != 0   # partial last block?
    lane_periodic = (LANES % n_cols) == 0            # positives repeat per row?

    def process(start_row, rows, tot_acc, pos_acc):
        t = t_ref[pl.ds(start_row, rows), :].astype(jnp.float32)
        s = s_ref[pl.ds(start_row, rows), :].astype(jnp.float32)

        # (KGE_MARGIN - t) - (KGE_MARGIN - s) == s - t ; abs() makes the sign
        # moot, so the margin subtraction cancels algebraically.
        r = jnp.abs(s - t)
        rc = jnp.minimum(r, DELTA)
        hub = 0.5 * rc * rc + DELTA * jnp.maximum(r - DELTA, 0.0)

        if needs_row_mask or not lane_periodic:
            row = (lax.broadcasted_iota(jnp.int32, hub.shape, 0)
                   + (block_row0 + start_row))
        if needs_row_mask:
            # Pallas pads a partial last block with undefined VMEM contents;
            # jnp.where discards whatever (NaN/Inf included) sits there.
            hub = jnp.where(row < total_rows, hub, 0.0)

        # Positive-score slots: flat index == 0 (mod n_cols) in the original
        # row-major (B, N) layout.  The wrapper zero-pads the flat tail, so
        # padded elements contribute huber == 0 even if they alias such a slot.
        col = lax.broadcasted_iota(jnp.int32, hub.shape, 1)
        if lane_periodic:
            # n_cols divides 128 -> n_cols is a power of two and every repacked
            # row starts at a multiple of n_cols: mask is a fixed lane pattern.
            pos = (col & (n_cols - 1)) == 0
        else:
            # TODO(synk): general-N fallback uses int32 vector remainder; for
            #             inputs beyond 2**31 elements (or toolchains without
            #             vector rem) switch to a separate positive-column input.
            pos = ((row * LANES + col) % n_cols) == 0
        hub_pos = jnp.where(pos, hub, 0.0)

        # Reduce only across groups of 8 sublanes -> pure vreg adds; the
        # cross-lane combine happens once, outside the kernel.
        g = rows // SUBLANES
        tot_acc = tot_acc + jnp.sum(hub.reshape(g, SUBLANES, LANES), axis=0)
        pos_acc = pos_acc + jnp.sum(hub_pos.reshape(g, SUBLANES, LANES), axis=0)
        return tot_acc, pos_acc

    zeros = jnp.zeros((SUBLANES, LANES), jnp.float32)
    n_full = tile_rows // chunk_rows
    tail = tile_rows - n_full * chunk_rows

    def body(c, carry):
        start = pl.multiple_of(c * chunk_rows, SUBLANES)
        return process(start, chunk_rows, *carry)

    tot_acc, pos_acc = lax.fori_loop(0, n_full, body, (zeros, zeros))
    if tail:  # static remainder chunk (tail is a multiple of 8 by construction)
        tot_acc, pos_acc = process(n_full * chunk_rows, tail, tot_acc, pos_acc)

    tot_ref[...] = tot_acc[None]
    pos_ref[...] = pos_acc[None]


def _repack_lane_dense(x):
    """Flatten to 1-D and view as (rows, 128) so every lane carries real data
    even for narrow N.  Free (pure reshape) when B*N % 1024 == 0; otherwise
    jnp.pad costs one extra copy pass over the input."""
    flat = x.reshape(-1)
    pad = (-flat.shape[0]) % (SUBLANES * LANES)
    if pad:
        flat = jnp.pad(flat, (0, pad))   # zero pad -> huber == 0 there
    return flat.reshape(-1, LANES)


def _pick_tile_rows(total_rows, itemsize, vmem_cap):
    """~8 MiB per input block (2 inputs x 2 pipeline buffers ~= 32 MiB), but
    never more than vmem_cap/8 per block so v7x's 64 MiB VMEM stays safe."""
    target_bytes = min(8 * 1024 * 1024, vmem_cap // 8)
    rows = max(SUBLANES,
               (target_bytes // (LANES * itemsize)) // SUBLANES * SUBLANES)
    return min(rows, total_rows)


def huber_loss_pallas(t_score, s_score):
    """Returns (loss, p_loss, n_loss) scalars — the PyTorch module's forward
    with adv_temperature=None and a subsampling_weight supplied (plain means)."""
    assert t_score.shape == s_score.shape and t_score.ndim == 2
    B, N = t_score.shape
    assert N >= 2, "need at least 1 positive + 1 negative score per row"
    itemsize = jnp.dtype(t_score.dtype).itemsize

    try:
        vmem_cap = int(getattr(pltpu.get_tpu_info(), "vmem_capacity_bytes",
                               64 * 1024 * 1024))
    except Exception:
        vmem_cap = 64 * 1024 * 1024          # assume the smallest (v7x) VMEM

    t2 = _repack_lane_dense(t_score)
    s2 = _repack_lane_dense(s_score)
    R = t2.shape[0]                          # multiple of 8 by construction
    TR = _pick_tile_rows(R, itemsize, vmem_cap)
    CHUNK = min(_CHUNK_ROWS, TR)
    NB = pl.cdiv(R, TR)

    kernel = functools.partial(_huber_partial_kernel,
                               tile_rows=TR, chunk_rows=CHUNK,
                               total_rows=R, n_cols=N)

    out_shape = (
        jax.ShapeDtypeStruct((NB, SUBLANES, LANES), jnp.float32),  # all-elem sums
        jax.ShapeDtypeStruct((NB, SUBLANES, LANES), jnp.float32),  # positive sums
    )
    grid_spec = pltpu.PrefetchScalarGridSpec(
        num_scalar_prefetch=0,
        grid=(NB,),
        in_specs=[
            pl.BlockSpec((TR, LANES), lambda i: (i, 0)),
            pl.BlockSpec((TR, LANES), lambda i: (i, 0)),
        ],
        out_specs=[
            pl.BlockSpec((1, SUBLANES, LANES), lambda i: (i, 0, 0)),
            pl.BlockSpec((1, SUBLANES, LANES), lambda i: (i, 0, 0)),
        ],
    )
    cost = pl.CostEstimate(
        flops=int(12 * R * LANES),
        transcendentals=0,
        bytes_accessed=int(2 * R * LANES * itemsize
                           + 2 * NB * SUBLANES * LANES * 4),
    )
    tot_part, pos_part = pl.pallas_call(
        kernel,
        out_shape=out_shape,
        grid_spec=grid_spec,
        compiler_params=pltpu.CompilerParams(
            # Blocks are fully independent -> megacore split on v7x, harmless
            # (serial loop) on single-TensorCore v5e/v6e.
            dimension_semantics=("parallel",),
            vmem_limit_bytes=min(3 * vmem_cap // 4, 48 * 1024 * 1024),
        ),
        cost_estimate=cost,
    )(t2, s2)

    # Tiny final combine (NB*1024 f32 per output) + scalar math — negligible
    # next to the streaming pass, and keeps lane-parallel partial-sum accuracy.
    tot = jnp.sum(tot_part)
    p_sum = jnp.sum(pos_part)
    n_sum = tot - p_sum
    p_loss = p_sum / B
    n_loss = n_sum / (B * (N - 1))
    loss = 0.5 * (p_loss + n_loss)
    return loss, p_loss, n_loss


def huber_loss_ref(t_score, s_score):
    """Plain-JAX reference mirroring the PyTorch forward exactly."""
    t = KGE_MARGIN - t_score
    s = KGE_MARGIN - s_score
    r = jnp.abs(t - s)
    cond = (r < DELTA).astype(jnp.float32)
    hub = cond * 0.5 * r**2 + (1.0 - cond) * (DELTA * r - 0.5 * DELTA**2)
    p_loss = hub[:, 0].mean()
    n_loss = hub[:, 1:].mean(axis=1).mean()
    return (p_loss + n_loss) / 2.0, p_loss, n_loss


if __name__ == "__main__":
    key = jax.random.PRNGKey(0)
    k1, k2 = jax.random.split(key)
    B, N = 8, 32  # 1 positive + 31 negative scores per example
    t_score = jax.random.normal(k1, (B, N), dtype=jnp.float32) * 2.0
    s_score = jax.random.normal(k2, (B, N), dtype=jnp.float32) * 2.0

    loss, p_loss, n_loss = jax.jit(huber_loss_pallas)(t_score, s_score)
    jax.block_until_ready((loss, p_loss, n_loss))

    loss_r, p_r, n_r = huber_loss_ref(t_score, s_score)
    assert jnp.allclose(loss, loss_r, atol=1e-5), (loss, loss_r)
    assert jnp.allclose(p_loss, p_r, atol=1e-5), (p_loss, p_r)
    assert jnp.allclose(n_loss, n_r, atol=1e-5), (n_loss, n_r)

    print("KERNEL_OK")
</pallas_src>

<mosaic_0001>
module attributes {stable_mosaic.version = 11 : i64} {
  func.func @_huber_partial_kernel(%arg0: i32, %arg1: memref<8x128xf32, #tpu.memory_space<vmem>>, %arg2: memref<8x128xf32, #tpu.memory_space<vmem>>, %arg3: memref<1x8x128xf32, #tpu.memory_space<vmem>>, %arg4: memref<1x8x128xf32, #tpu.memory_space<vmem>>) attributes {dimension_semantics = [#tpu.dimension_semantics<parallel>], iteration_bounds = array<i64: 1>, scalar_prefetch = 0 : i64, scratch_operands = 0 : i64, tpu.core_type = #tpu.core_type<tc>, window_params = [{transform_indices = @transform_0, window_bounds = array<i64: 8, 128>}, {transform_indices = @transform_1, window_bounds = array<i64: 8, 128>}, {transform_indices = @transform_2, window_bounds = array<i64: 1, 8, 128>}, {transform_indices = @transform_3, window_bounds = array<i64: 1, 8, 128>}]} {
    %cst = arith.constant 0.000000e+00 : f32
    %0 = vector.broadcast %cst : f32 to vector<8x128xf32>
    %c0_i32 = arith.constant 0 : i32
    %c8_i32 = arith.constant 8 : i32
    %1 = arith.muli %c0_i32, %c8_i32 : i32
    %2 = tpu.assume_multiple %1, 8 : i32
    %3 = arith.index_cast %2 : i32 to index
    %c0 = arith.constant 0 : index
    %4 = vector.load %arg1[%3, %c0] : memref<8x128xf32, #tpu.memory_space<vmem>>, vector<8x128xf32>
    %5 = arith.index_cast %2 : i32 to index
    %c0_0 = arith.constant 0 : index
    %6 = vector.load %arg2[%5, %c0_0] : memref<8x128xf32, #tpu.memory_space<vmem>>, vector<8x128xf32>
    %7 = arith.subf %6, %4 : vector<8x128xf32>
    %8 = math.absf %7 : vector<8x128xf32>
    %cst_1 = arith.constant 1.000000e+00 : f32
    %9 = vector.broadcast %cst_1 : f32 to vector<8x128xf32>
    %10 = arith.minimumf %8, %9 : vector<8x128xf32>
    %cst_2 = arith.constant 5.000000e-01 : f32
    %11 = vector.broadcast %cst_2 : f32 to vector<8x128xf32>
    %12 = arith.mulf %11, %10 : vector<8x128xf32>
    %13 = arith.mulf %12, %10 : vector<8x128xf32>
    %cst_3 = arith.constant 1.000000e+00 : f32
    %14 = vector.broadcast %cst_3 : f32 to vector<8x128xf32>
    %15 = arith.subf %8, %14 : vector<8x128xf32>
    %cst_4 = arith.constant 0.000000e+00 : f32
    %16 = vector.broadcast %cst_4 : f32 to vector<8x128xf32>
    %17 = arith.maximumf %15, %16 : vector<8x128xf32>
    %cst_5 = arith.constant 1.000000e+00 : f32
    %18 = vector.broadcast %cst_5 : f32 to vector<8x128xf32>
    %19 = arith.mulf %18, %17 : vector<8x128xf32>
    %20 = arith.addf %13, %19 : vector<8x128xf32>
    %21 = tpu.iota {dimensions = array<i32: 1>} : vector<8x128xi32>
    %c31_i32 = arith.constant 31 : i32
    %22 = vector.broadcast %c31_i32 : i32 to vector<8x128xi32>
    %23 = arith.andi %21, %22 : vector<8x128xi32>
    %c0_i32_6 = arith.constant 0 : i32
    %24 = vector.broadcast %c0_i32_6 : i32 to vector<8x128xi32>
    %25 = arith.cmpi eq, %23, %24 : vector<8x128xi32>
    %cst_7 = arith.constant 0.000000e+00 : f32
    %26 = vector.broadcast %cst_7 : f32 to vector<8x128xf32>
    %27 = arith.select %25, %20, %26 : vector<8x128xi1>, vector<8x128xf32>
    %28 = vector.shape_cast %20 : vector<8x128xf32> to vector<1x8x128xf32>
    %cst_8 = arith.constant dense<0.000000e+00> : vector<8x128xf32>
    %29 = vector.multi_reduction <add>, %28, %cst_8 [0] : vector<1x8x128xf32> to vector<8x128xf32>
    %30 = arith.addf %0, %29 : vector<8x128xf32>
    %31 = vector.shape_cast %27 : vector<8x128xf32> to vector<1x8x128xf32>
    %cst_9 = arith.constant dense<0.000000e+00> : vector<8x128xf32>
    %32 = vector.multi_reduction <add>, %31, %cst_9 [0] : vector<1x8x128xf32> to vector<8x128xf32>
    %33 = arith.addf %0, %32 : vector<8x128xf32>
    %c1_i32 = arith.constant 1 : i32
    %34 = vector.shape_cast %30 : vector<8x128xf32> to vector<1x8x128xf32>
    %c0_10 = arith.constant 0 : index
    %c0_11 = arith.constant 0 : index
    %c0_12 = arith.constant 0 : index
    %35 = vector.load %arg3[%c0_10, %c0_11, %c0_12] : memref<1x8x128xf32, #tpu.memory_space<vmem>>, vector<1x8x128xf32>
    tpu.vector_store %arg3[%c0_10, %c0_11, %c0_12], %34 {strides = array<i32>} : memref<1x8x128xf32, #tpu.memory_space<vmem>>, vector<1x8x128xf32>,
    %36 = vector.shape_cast %33 : vector<8x128xf32> to vector<1x8x128xf32>
    %c0_13 = arith.constant 0 : index
    %c0_14 = arith.constant 0 : index
    %c0_15 = arith.constant 0 : index
    %37 = vector.load %arg4[%c0_13, %c0_14, %c0_15] : memref<1x8x128xf32, #tpu.memory_space<vmem>>, vector<1x8x128xf32>
    tpu.vector_store %arg4[%c0_13, %c0_14, %c0_15], %36 {strides = array<i32>} : memref<1x8x128xf32, #tpu.memory_space<vmem>>, vector<1x8x128xf32>,
    return
  }
  func.func @transform_0(%arg0: i32) -> (i32, i32) {
    %c0_i32 = arith.constant 0 : i32
    %c0_i32_0 = arith.constant 0 : i32
    return %arg0, %c0_i32 : i32, i32
  }
  func.func @transform_1(%arg0: i32) -> (i32, i32) {
    %c0_i32 = arith.constant 0 : i32
    %c0_i32_0 = arith.constant 0 : i32
    return %arg0, %c0_i32 : i32, i32
  }
  func.func @transform_2(%arg0: i32) -> (i32, i32, i32) {
    %c0_i32 = arith.constant 0 : i32
    %c0_i32_0 = arith.constant 0 : i32
    %c0_i32_1 = arith.constant 0 : i32
    return %arg0, %c0_i32, %c0_i32_0 : i32, i32, i32
  }
  func.func @transform_3(%arg0: i32) -> (i32, i32, i32) {
    %c0_i32 = arith.constant 0 : i32
    %c0_i32_0 = arith.constant 0 : i32
    %c0_i32_1 = arith.constant 0 : i32
    return %arg0, %c0_i32, %c0_i32_0 : i32, i32, i32
  }
}

</mosaic_0001>

<llo_original>
// kernel: huber_loss_pallas.1
$region0: #{huber_loss_pallas.1}
  #allocation0 [shape = 'u32[]', space=smem, size = 0x4, offset = 0x4, fixed_abs, tag = 'smem constant byte address 0x4 - core index']
  #allocation1 [shape = 'u32[72,128]{1,0:T(1,128)}', space=vmem, size = 0x9000, scoped, tag = 'internal scratch']
  %s0 = inlined_call_operand.vmem [shape: f32[8,128], index: 0, kind: input, shape index: {}]
  %s1 = inlined_call_operand.vmem [shape: f32[8,128], index: 1, kind: input, shape index: {}]
  %s2 = inlined_call_operand.vmem [shape: f32[1,8,128], index: 2, kind: output, shape index: {0}]
  %s3 = inlined_call_operand.vmem [shape: f32[1,8,128], index: 3, kind: output, shape index: {1}]
  %4 = xla_tuple %s2, %s3
  %s5 = sld [smem:[#allocation0]]
  $region26: #{huber_loss_pallas.1} parent=0
    _
  %s7 = ssub.s32 1, %s5
  %s8 = scalar_select 0, %s7, %s5
  // Predicated region
  $region2: #{huber_loss_pallas.1} parent=0 // pred_check
    _
  $region3: #{huber_loss_pallas.1} parent=0 // pred_check_branch
    %10 = sbr.rel (0) target = $region5
  $region4: #{huber_loss_pallas.1} parent=0 // pred_region
    _
  $region5: #{huber_loss_pallas.1} parent=0 // pred_fallthru
    _
  // Predicated region
  $region6: #{huber_loss_pallas.1} parent=0 // pred_check
    _
  $region7: #{huber_loss_pallas.1} parent=0 // pred_check_branch
    %12 = sbr.rel (0) target = $region9
  $region8: #{huber_loss_pallas.1} parent=0 // pred_region
    _
  $region9: #{huber_loss_pallas.1} parent=0 // pred_fallthru
    _
  %v13 = vld [vmem:[%s0] sm:$0xff]
  %v14 = vld [vmem:[%s1] sm:$0xff]
  %v15 = vsub.f32 %v14, %v13
  %v16 = vand.u32 2147483647, %v15
  %v17 = vmin.f32 %v16, 1.0
  %v18 = vmul.f32 %v17, 0.5
  %v19 = vmul.f32 %v18, %v17
  %v20 = vsub.f32 %v16, 1.0
  %v21 = vmax.f32 %v20, 0.0
  %v22 = vadd.f32 %v19, %v21
  %v23 = vlaneseq
  %v24 = vand.u32 %v23, 127
  %v25 = vand.u32 %v24, 31
  %vm26 = vcmp.eq.s32.totalorder %v25, 0
  %v27 = vsel %vm26, %v22, 0.0
  %v28 = vadd.f32 %v22, 0.0
  %v29 = vadd.f32 %v28, 0.0
  %v30 = vadd.f32 %v27, 0.0
  %v31 = vadd.f32 %v30, 0.0
  %32 = vst [vmem:[%s2] sm:$0xff] %v29
  %33 = vst [vmem:[%s3] sm:$0xff] %v31
  // Predicated region
  $region10: #{huber_loss_pallas.1} parent=0 // pred_check
    _
  $region11: #{huber_loss_pallas.1} parent=0 // pred_check_branch
    %35 = sbr.rel (0) target = $region13
  $region12: #{huber_loss_pallas.1} parent=0 // pred_region
    _
  $region13: #{huber_loss_pallas.1} parent=0 // pred_fallthru
    _
  // Predicated region
  $region14: #{huber_loss_pallas.1} parent=0 // pred_check
    _
  $region15: #{huber_loss_pallas.1} parent=0 // pred_check_branch
    %37 = sbr.rel (0) target = $region17
  $region16: #{huber_loss_pallas.1} parent=0 // pred_region
    _
  $region17: #{huber_loss_pallas.1} parent=0 // pred_fallthru
    _
  // Predicated region
  $region18: #{huber_loss_pallas.1} parent=0 // pred_check
    _
  $region19: #{huber_loss_pallas.1} parent=0 // pred_check_branch
    %39 = sbr.rel (0) target = $region21
  $region20: #{huber_loss_pallas.1} parent=0 // pred_region
    _
  $region21: #{huber_loss_pallas.1} parent=0 // pred_fallthru
    _
  // Predicated region
  $region22: #{huber_loss_pallas.1} parent=0 // pred_check
    _
  $region23: #{huber_loss_pallas.1} parent=0 // pred_check_branch
    %41 = sbr.rel (0) target = $region25
  $region24: #{huber_loss_pallas.1} parent=0 // pred_region
    _
  $region25: #{huber_loss_pallas.1} parent=0 // pred_fallthru
    _

</llo_original>
